<compile_context>
chip_gen: v5e
topology: v5e:2x2
jax: 0.10.0
libtpu: 0.0.40
codegen_flags: <defaults>
</compile_context>

<pallas_src>
import functools

import jax
import jax.numpy as jnp
from jax import lax
from jax.experimental import pallas as pl
from jax.experimental.pallas import tpu as pltpu


SIZES = [32, 64, 32, 1]   # sizes[-1] == 1 -> final activation is Sigmoid


def mlp_kernel(x_ref,
               w1_ref, b1_ref,
               w2_ref, b2_ref,
               w3_ref, b3_ref,
               o_ref):
    """One batch tile. x_ref: (tb, in) bf16 (native layout); o_ref: (1, tb) f32.

    The first dot_general contracts in-dim vs in-dim, so from layer 0 onward
    activations live as [features, batch] with the batch on the lane axis.
    """
    x = x_ref[...]                                              # (tb, in) bf16

    # layer 0: Linear -> ReLU   (Dropout == identity in eval)
    # (h1, in) . (tb, in)^T -> (h1, tb): batch lands on lanes, no wrapper
    # transpose needed; f32 accumulation on the MXU.
    h = lax.dot_general(w1_ref[...], x,
                        dimension_numbers=(((1,), (1,)), ((), ())),
                        preferred_element_type=jnp.float32) + b1_ref[...]
    h = jnp.maximum(h, 0.0).astype(jnp.bfloat16)                # (h1, tb) bf16

    # layer 1: Linear -> ReLU   (Dropout == identity in eval)
    h = jnp.dot(w2_ref[...], h,
                preferred_element_type=jnp.float32) + b2_ref[...]
    h = jnp.maximum(h, 0.0).astype(jnp.bfloat16)                # (h2, tb) bf16

    # layer 2: out_features == 1 -> VPU multiply + sublane reduce gives a
    # lane-dense (1, tb) result instead of a 99%-padded MXU pass.
    # (bf16 * f32 promotes to f32; sum accumulates in f32.)
    logit = jnp.sum(h * w3_ref[...], axis=0, keepdims=True) + b3_ref[...]
    o_ref[...] = jax.nn.sigmoid(logit)                          # (1, tb) f32


@functools.partial(jax.jit, static_argnames=("tb",))
def net_forward(x, kparams, *, tb=2048):
    """x: (batch, in). kparams from prepare_params(). Returns (batch, 1) f32.

    tb: batch tile (multiple of 128). Sweep 1024-4096 for large batches; keep
    it small enough that cdiv(batch, tb) >= 2 so both v7x TensorCores are used.
    """
    w1, b1, w2, b2, w3, b3 = kparams
    batch, in_dim = x.shape
    h1, h2 = w1.shape[0], w2.shape[0]
    assert tb % 128 == 0, "tile must be lane-dense (multiple of 128)"

    num_tiles = pl.cdiv(batch, tb)

    # Only wrapper-side data movement: a single cast of x to bf16 (the MXU
    # consumes bf16 anyway).  No transpose, no pad -- partial last tiles are
    # handled by Pallas (columns are independent; tail lanes never stored).
    x_bf = x.astype(jnp.bfloat16)

    # Full-array blocks with a constant index_map -> loaded once, VMEM-resident.
    full = lambda a: pl.BlockSpec(a.shape, lambda i: (0, 0))

    param_bytes = sum(int(a.size) * a.dtype.itemsize for a in kparams)
    cost = pl.CostEstimate(
        flops=2 * batch * (in_dim * h1 + h1 * h2 + h2 * 1),
        transcendentals=batch,                          # final sigmoid
        bytes_accessed=batch * in_dim * 2               # bf16 x stream
                       + batch * 4                      # f32 output row
                       + param_bytes)

    out_row = pl.pallas_call(
        mlp_kernel,
        out_shape=jax.ShapeDtypeStruct((1, batch), jnp.float32),
        grid=(num_tiles,),
        in_specs=[
            pl.BlockSpec((tb, in_dim), lambda i: (i, 0)),   # pipelined x tiles
            full(w1), full(b1), full(w2), full(b2), full(w3), full(b3),
        ],
        out_specs=pl.BlockSpec((1, tb), lambda i: (0, i)),  # lane-dense store
        compiler_params=pltpu.CompilerParams(
            dimension_semantics=("parallel",)),             # v7x: 2 TCs
        cost_estimate=cost,
    )(x_bf, w1, b1, w2, b2, w3, b3)

    return out_row[0, :batch].reshape(batch, 1)


def init_params(key, sizes):
    """nn.Linear-style init (PyTorch layout): W [out, in], b [out],
    U(-1/sqrt(fan_in), 1/sqrt(fan_in))."""
    params = []
    for i in range(len(sizes) - 1):
        fan_in, fan_out = sizes[i], sizes[i + 1]
        key, kw, kb = jax.random.split(key, 3)
        bound = 1.0 / jnp.sqrt(fan_in)
        w = jax.random.uniform(kw, (fan_out, fan_in), jnp.float32, -bound, bound)
        b = jax.random.uniform(kb, (fan_out,), jnp.float32, -bound, bound)
        params.append((w, b))
    return params


def prepare_params(params):
    """One-time conversion from PyTorch layout to the kernel layout/dtypes."""
    (w1, b1), (w2, b2), (w3, b3) = params
    return (
        w1.astype(jnp.bfloat16), b1.reshape(-1, 1).astype(jnp.float32),
        w2.astype(jnp.bfloat16), b2.reshape(-1, 1).astype(jnp.float32),
        w3.reshape(-1, 1).astype(jnp.float32),   # (in, 1) column for the reduce
        b3.reshape(1, 1).astype(jnp.float32),
    )


def net_forward_ref(x, params):
    """Pure-JAX f32 reference of Net.forward (eval mode)."""
    (w1, b1), (w2, b2), (w3, b3) = params
    h = jnp.maximum(x.astype(jnp.float32) @ w1.T + b1, 0.0)
    h = jnp.maximum(h @ w2.T + b2, 0.0)
    return jax.nn.sigmoid(h @ w3.T + b3)


if __name__ == "__main__":
    key = jax.random.PRNGKey(0)
    key, kx = jax.random.split(key)

    batch = 200   # not a multiple of the tile -> exercises partial last tile + 2 grid steps
    x = jax.random.normal(kx, (batch, SIZES[0]), jnp.float32)
    params = init_params(key, SIZES)
    kparams = prepare_params(params)

    out = net_forward(x, kparams, tb=128)   # small tb for the tiny test batch
    out = jax.block_until_ready(out)

    assert out.shape == (batch, SIZES[-1])
    assert bool(jnp.all((out >= 0.0) & (out <= 1.0)))   # sigmoid range sanity check

    ref = net_forward_ref(x, params)
    max_err = float(jnp.max(jnp.abs(out - ref)))
    assert bool(jnp.allclose(out, ref, atol=2e-2, rtol=2e-2)), max_err

    print("KERNEL_OK")
</pallas_src>

<mosaic_0001>
module attributes {stable_mosaic.version = 11 : i64} {
  func.func @mlp_kernel(%arg0: i32, %arg1: memref<128x32xbf16, #tpu.memory_space<vmem>>, %arg2: memref<64x32xbf16, #tpu.memory_space<vmem>>, %arg3: memref<64x1xf32, #tpu.memory_space<vmem>>, %arg4: memref<32x64xbf16, #tpu.memory_space<vmem>>, %arg5: memref<32x1xf32, #tpu.memory_space<vmem>>, %arg6: memref<32x1xf32, #tpu.memory_space<vmem>>, %arg7: memref<1x1xf32, #tpu.memory_space<vmem>>, %arg8: memref<1x128xf32, #tpu.memory_space<vmem>>) attributes {dimension_semantics = [#tpu.dimension_semantics<parallel>], iteration_bounds = array<i64: 2>, scalar_prefetch = 0 : i64, scratch_operands = 0 : i64, tpu.core_type = #tpu.core_type<tc>, window_params = [{transform_indices = @transform_0, window_bounds = array<i64: 128, 32>}, {pipeline_mode = #tpu.pipeline_mode<synchronous>, transform_indices = @transform_1, window_bounds = array<i64: 64, 32>}, {pipeline_mode = #tpu.pipeline_mode<synchronous>, transform_indices = @transform_2, window_bounds = array<i64: 64, 1>}, {pipeline_mode = #tpu.pipeline_mode<synchronous>, transform_indices = @transform_3, window_bounds = array<i64: 32, 64>}, {pipeline_mode = #tpu.pipeline_mode<synchronous>, transform_indices = @transform_4, window_bounds = array<i64: 32, 1>}, {pipeline_mode = #tpu.pipeline_mode<synchronous>, transform_indices = @transform_5, window_bounds = array<i64: 32, 1>}, {pipeline_mode = #tpu.pipeline_mode<synchronous>, transform_indices = @transform_6, window_bounds = array<i64: 1, 1>}, {transform_indices = @transform_7, window_bounds = array<i64: 1, 128>}]} {
    %c0 = arith.constant 0 : index
    %c0_0 = arith.constant 0 : index
    %0 = vector.load %arg1[%c0, %c0_0] : memref<128x32xbf16, #tpu.memory_space<vmem>>, vector<128x32xbf16>
    %c0_1 = arith.constant 0 : index
    %c0_2 = arith.constant 0 : index
    %1 = vector.load %arg2[%c0_1, %c0_2] : memref<64x32xbf16, #tpu.memory_space<vmem>>, vector<64x32xbf16>
    %cst = arith.constant dense<0.000000e+00> : vector<64x128xf32>
    %2 = tpu.matmul %1, %0, %cst {dimension_numbers = #tpu.dot_dimension_numbers<[1], [1], [0], [0], [0, 0, 1, 0], [], []>} : vector<64x32xbf16>, vector<128x32xbf16>, vector<64x128xf32> -> vector<64x128xf32>
    %c0_3 = arith.constant 0 : index
    %c0_4 = arith.constant 0 : index
    %3 = vector.load %arg3[%c0_3, %c0_4] : memref<64x1xf32, #tpu.memory_space<vmem>>, vector<64x1xf32>
    %4 = vector.broadcast %3 : vector<64x1xf32> to vector<64x128xf32>
    %5 = arith.addf %2, %4 : vector<64x128xf32>
    %cst_5 = arith.constant 0.000000e+00 : f32
    %6 = vector.broadcast %cst_5 : f32 to vector<64x128xf32>
    %7 = arith.maximumf %5, %6 : vector<64x128xf32>
    %8 = arith.truncf %7 : vector<64x128xf32> to vector<64x128xbf16>
    %c0_6 = arith.constant 0 : index
    %c0_7 = arith.constant 0 : index
    %9 = vector.load %arg4[%c0_6, %c0_7] : memref<32x64xbf16, #tpu.memory_space<vmem>>, vector<32x64xbf16>
    %cst_8 = arith.constant dense<0.000000e+00> : vector<32x128xf32>
    %10 = tpu.matmul %9, %8, %cst_8 {dimension_numbers = #tpu.dot_dimension_numbers<[1], [0], [0], [1], [0, 0, 1, 1], [], []>} : vector<32x64xbf16>, vector<64x128xbf16>, vector<32x128xf32> -> vector<32x128xf32>
    %c0_9 = arith.constant 0 : index
    %c0_10 = arith.constant 0 : index
    %11 = vector.load %arg5[%c0_9, %c0_10] : memref<32x1xf32, #tpu.memory_space<vmem>>, vector<32x1xf32>
    %12 = vector.broadcast %11 : vector<32x1xf32> to vector<32x128xf32>
    %13 = arith.addf %10, %12 : vector<32x128xf32>
    %cst_11 = arith.constant 0.000000e+00 : f32
    %14 = vector.broadcast %cst_11 : f32 to vector<32x128xf32>
    %15 = arith.maximumf %13, %14 : vector<32x128xf32>
    %16 = arith.truncf %15 : vector<32x128xf32> to vector<32x128xbf16>
    %c0_12 = arith.constant 0 : index
    %c0_13 = arith.constant 0 : index
    %17 = vector.load %arg6[%c0_12, %c0_13] : memref<32x1xf32, #tpu.memory_space<vmem>>, vector<32x1xf32>
    %18 = arith.extf %16 : vector<32x128xbf16> to vector<32x128xf32>
    %19 = vector.broadcast %17 : vector<32x1xf32> to vector<32x128xf32>
    %20 = arith.mulf %18, %19 : vector<32x128xf32>
    %cst_14 = arith.constant dense<0.000000e+00> : vector<128xf32>
    %21 = vector.multi_reduction <add>, %20, %cst_14 [0] : vector<32x128xf32> to vector<128xf32>
    %22 = vector.shape_cast %21 : vector<128xf32> to vector<1x128xf32>
    %c0_15 = arith.constant 0 : index
    %c0_16 = arith.constant 0 : index
    %23 = vector.load %arg7[%c0_15, %c0_16] : memref<1x1xf32, #tpu.memory_space<vmem>>, vector<1x1xf32>
    %24 = vector.broadcast %23 : vector<1x1xf32> to vector<1x128xf32>
    %25 = arith.addf %22, %24 : vector<1x128xf32>
    %26 = arith.negf %25 : vector<1x128xf32>
    %27 = math.exp %26 : vector<1x128xf32>
    %cst_17 = arith.constant 1.000000e+00 : f32
    %28 = vector.broadcast %cst_17 : f32 to vector<1x128xf32>
    %29 = arith.addf %28, %27 : vector<1x128xf32>
    %30 = arith.divf %28, %29 : vector<1x128xf32>
    %c0_18 = arith.constant 0 : index
    %c0_19 = arith.constant 0 : index
    %31 = vector.load %arg8[%c0_18, %c0_19] : memref<1x128xf32, #tpu.memory_space<vmem>>, vector<1x128xf32>
    tpu.vector_store %arg8[%c0_18, %c0_19], %30 {strides = array<i32>} : memref<1x128xf32, #tpu.memory_space<vmem>>, vector<1x128xf32>,
    return
  }
  func.func @transform_0(%arg0: i32) -> (i32, i32) {
    %c0_i32 = arith.constant 0 : i32
    %c0_i32_0 = arith.constant 0 : i32
    return %arg0, %c0_i32 : i32, i32
  }
  func.func @transform_1(%arg0: i32) -> (i32, i32) {
    %c0_i32 = arith.constant 0 : i32
    %c0_i32_0 = arith.constant 0 : i32
    %c0_i32_1 = arith.constant 0 : i32
    return %c0_i32, %c0_i32_0 : i32, i32
  }
  func.func @transform_2(%arg0: i32) -> (i32, i32) {
    %c0_i32 = arith.constant 0 : i32
    %c0_i32_0 = arith.constant 0 : i32
    %c0_i32_1 = arith.constant 0 : i32
    return %c0_i32, %c0_i32_0 : i32, i32
  }
  func.func @transform_3(%arg0: i32) -> (i32, i32) {
    %c0_i32 = arith.constant 0 : i32
    %c0_i32_0 = arith.constant 0 : i32
    %c0_i32_1 = arith.constant 0 : i32
    return %c0_i32, %c0_i32_0 : i32, i32
  }
  func.func @transform_4(%arg0: i32) -> (i32, i32) {
    %c0_i32 = arith.constant 0 : i32
    %c0_i32_0 = arith.constant 0 : i32
    %c0_i32_1 = arith.constant 0 : i32
    return %c0_i32, %c0_i32_0 : i32, i32
  }
  func.func @transform_5(%arg0: i32) -> (i32, i32) {
    %c0_i32 = arith.constant 0 : i32
    %c0_i32_0 = arith.constant 0 : i32
    %c0_i32_1 = arith.constant 0 : i32
    return %c0_i32, %c0_i32_0 : i32, i32
  }
  func.func @transform_6(%arg0: i32) -> (i32, i32) {
    %c0_i32 = arith.constant 0 : i32
    %c0_i32_0 = arith.constant 0 : i32
    %c0_i32_1 = arith.constant 0 : i32
    return %c0_i32, %c0_i32_0 : i32, i32
  }
  func.func @transform_7(%arg0: i32) -> (i32, i32) {
    %c0_i32 = arith.constant 0 : i32
    %c0_i32_0 = arith.constant 0 : i32
    return %c0_i32, %arg0 : i32, i32
  }
}

</mosaic_0001>

<llo_original>
// kernel: net_forward.1
$region0: #{net_forward.1}
  #allocation0 [shape = 'u32[]', space=smem, size = 0x4, offset = 0x4, fixed_abs, tag = 'smem constant byte address 0x4 - core index']
  #allocation1 [shape = 'u32[72,128]{1,0:T(1,128)}', space=vmem, size = 0x9000, scoped, tag = 'internal scratch']
  #allocation2 [shape = 'f32[1,1]{1,0:T(1,128)S(1)}', space=vmem, size = 0x200, scoped, tag = 'scoped memory for net_forward.1']
  %s0 = inlined_call_operand.vmem [shape: bf16[200,32], index: 0, kind: input, shape index: {}]
  %s1 = inlined_call_operand.vmem [shape: bf16[64,32], index: 1, kind: input, shape index: {}]
  %s2 = inlined_call_operand.vmem [shape: f32[64,1], index: 2, kind: input, shape index: {}]
  %s3 = inlined_call_operand.vmem [shape: bf16[32,64], index: 3, kind: input, shape index: {}]
  %s4 = inlined_call_operand.vmem [shape: f32[32,1], index: 4, kind: input, shape index: {}]
  %s5 = inlined_call_operand.vmem [shape: f32[32,1], index: 5, kind: input, shape index: {}]
  %s6 = inlined_call_operand.<no memory space> [shape: f32[1,1], index: 6, kind: input, shape index: {}]
  %s7 = inlined_call_operand.hbm [shape: f32[1,200], index: 7, kind: output, shape index: {}]
  %s8 = sld [smem:[#allocation0]]
  $region61: #{net_forward.1} parent=0
    _
  %s10 = ssub.s32 1, %s8
  %s11 = scalar_select 0, %s10, %s8
  %v12 = vstv %s6
  %13 = vst [vmem:[#allocation2] sm:$0x1] %v12
  $region1: #{net_forward.1} parent=0
    #allocation3 [shape = 'u8[1024]{0}', space=vmem, size = 0x400, scoped, tag = 'output window, operand 0']
    #allocation4 [shape = 's32[2]{0}', space=sflag, size = 0x8, scoped, tag = 'scoped memory for net_forward.1']
    %14 = vsyncpa [#allocation4], 0
    %s15 = scalar_lea.sflag [#allocation4], 1
    %16 = vsyncpa %s15, 0
    loop: start=0, step=1, limit=4
    $region2: #{net_forward.1} parent=1 // loop_pre_header
      _
    $region3: #{net_forward.1} parent=1 // loop_header
      %s18 = sphi 0, %s22
      %p19 = scmp.ge.s32.totalorder %s18, 4
      %s28 = sphi 0, %s30
      %s31 = sphi 0, %s28
      %s32 = sphi 0, %s31
      %s48 = sphi 0, %s32
      %s52 = sphi 0, %s52
      %s54 = sphi 0, %s52
      %s55 = sphi 0, %s54
      %s69 = sphi 0, %s55
      %s73 = sphi 0, %s73
      %s75 = sphi 0, %s73
      %s76 = sphi 0, %s75
      %s90 = sphi 0, %s76
      %s94 = sphi 0, %s94
      %s96 = sphi 0, %s94
      %s97 = sphi 0, %s96
      %s111 = sphi 0, %s97
      %s115 = sphi 0, %s115
      %s117 = sphi 0, %s115
      %s118 = sphi 0, %s117
      %s132 = sphi 0, %s118
      %s136 = sphi 0, %s136
      %s138 = sphi 0, %s136
      %s139 = sphi 0, %s138
      %s153 = sphi 0, %s139
      %s157 = sphi 0, %s157
      %s159 = sphi 0, %s157
      %s160 = sphi 0, %s159
      %s174 = sphi 0, %s160
      %s180 = sphi 0, %s182
      %s183 = sphi 0, %s180
      %s184 = sphi 0, %s183
      %s200 = sphi 0, %s184
    $region4: #{net_forward.1} parent=1 // loop_header_branch
      %21 = sbr.rel (%p19) target = $region8
    $region5: #{net_forward.1} parent=1 // loop_body
      %s23 = ssub.s32 %s18, 1
      %s24 = ssub.s32 %s18, 2
      %s25 = sadd.s32 %s18, 1
      %s26 = ssub.s32 %s18, %s25
      %p27 = scmp.eq.s32.totalorder %s26, 0
      %s29 = sadd.s32 %s28, 1
      %s30 = scalar_select %p27, %s28, %s29
      %p33 = pneg %p27
      %p34 = scmp.eq.s32.totalorder %s18, 1
      %p35 = por %p33, %p34
      %p36 = scmp.ne.s32.totalorder %s28, %s31
      %p37 = scmp.eq.s32.totalorder %s18, 0
      %p38 = por %p36, %p37
      %p39 = scmp.ne.s32.totalorder %s28, %s31
      %p40 = scmp.eq.s32.totalorder %s23, 1
      %p41 = por %p39, %p40
      %p42 = scmp.ne.s32.totalorder %s31, %s32
      %p43 = scmp.eq.s32.totalorder %s23, 0
      %p44 = por %p42, %p43
      %p45 = scmp.ne.s32.totalorder %s31, %s32
      %p46 = scmp.eq.s32.totalorder %s24, 1
      %p47 = por %p45, %p46
      %p49 = scmp.ne.s32.totalorder %s32, %s48
      %p50 = scmp.eq.s32.totalorder %s24, 0
      %p51 = por %p49, %p50
      %s53 = sadd.s32 %s52, 1
      %p56 = scmp.eq.s32.totalorder %s18, 1
      %p57 = scmp.ne.s32.totalorder %s52, %s54
      %p58 = scmp.eq.s32.totalorder %s18, 0
      %p59 = por %p57, %p58
      %p60 = scmp.ne.s32.totalorder %s52, %s54
      %p61 = scmp.eq.s32.totalorder %s23, 1
      %p62 = por %p60, %p61
      %p63 = scmp.ne.s32.totalorder %s54, %s55
      %p64 = scmp.eq.s32.totalorder %s23, 0
      %p65 = por %p63, %p64
      %p66 = scmp.ne.s32.totalorder %s54, %s55
      %p67 = scmp.eq.s32.totalorder %s24, 1
      %p68 = por %p66, %p67
      %p70 = scmp.ne.s32.totalorder %s55, %s69
      %p71 = scmp.eq.s32.totalorder %s24, 0
      %p72 = por %p70, %p71
      %s74 = sadd.s32 %s73, 1
      %p77 = scmp.eq.s32.totalorder %s18, 1
      %p78 = scmp.ne.s32.totalorder %s73, %s75
      %p79 = scmp.eq.s32.totalorder %s18, 0
      %p80 = por %p78, %p79
      %p81 = scmp.ne.s32.totalorder %s73, %s75
      %p82 = scmp.eq.s32.totalorder %s23, 1
      %p83 = por %p81, %p82
      %p84 = scmp.ne.s32.totalorder %s75, %s76
      %p85 = scmp.eq.s32.totalorder %s23, 0
      %p86 = por %p84, %p85
      %p87 = scmp.ne.s32.totalorder %s75, %s76
      %p88 = scmp.eq.s32.totalorder %s24, 1
      %p89 = por %p87, %p88
      %p91 = scmp.ne.s32.totalorder %s76, %s90
      %p92 = scmp.eq.s32.totalorder %s24, 0
      %p93 = por %p91, %p92
      %s95 = sadd.s32 %s94, 1
      %p98 = scmp.eq.s32.totalorder %s18, 1
      %p99 = scmp.ne.s32.totalorder %s94, %s96
      %p100 = scmp.eq.s32.totalorder %s18, 0
      %p101 = por %p99, %p100
      %p102 = scmp.ne.s32.totalorder %s94, %s96
      %p103 = scmp.eq.s32.totalorder %s23, 1
      %p104 = por %p102, %p103
      %p105 = scmp.ne.s32.totalorder %s96, %s97
      %p106 = scmp.eq.s32.totalorder %s23, 0
      %p107 = por %p105, %p106
      %p108 = scmp.ne.s32.totalorder %s96, %s97
      %p109 = scmp.eq.s32.totalorder %s24, 1
      %p110 = por %p108, %p109
      %p112 = scmp.ne.s32.totalorder %s97, %s111
      %p113 = scmp.eq.s32.totalorder %s24, 0
      %p114 = por %p112, %p113
      %s116 = sadd.s32 %s115, 1
      %p119 = scmp.eq.s32.totalorder %s18, 1
      %p120 = scmp.ne.s32.totalorder %s115, %s117
      %p121 = scmp.eq.s32.totalorder %s18, 0
      %p122 = por %p120, %p121
      %p123 = scmp.ne.s32.totalorder %s115, %s117
      %p124 = scmp.eq.s32.totalorder %s23, 1
      %p125 = por %p123, %p124
      %p126 = scmp.ne.s32.totalorder %s117, %s118
      %p127 = scmp.eq.s32.totalorder %s23, 0
      %p128 = por %p126, %p127
      %p129 = scmp.ne.s32.totalorder %s117, %s118
      %p130 = scmp.eq.s32.totalorder %s24, 1
      %p131 = por %p129, %p130
      %p133 = scmp.ne.s32.totalorder %s118, %s132
      %p134 = scmp.eq.s32.totalorder %s24, 0
      %p135 = por %p133, %p134
      %s137 = sadd.s32 %s136, 1
      %p140 = scmp.eq.s32.totalorder %s18, 1
      %p141 = scmp.ne.s32.totalorder %s136, %s138
      %p142 = scmp.eq.s32.totalorder %s18, 0
      %p143 = por %p141, %p142
      %p144 = scmp.ne.s32.totalorder %s136, %s138
      %p145 = scmp.eq.s32.totalorder %s23, 1
      %p146 = por %p144, %p145
      %p147 = scmp.ne.s32.totalorder %s138, %s139
      %p148 = scmp.eq.s32.totalorder %s23, 0
      %p149 = por %p147, %p148
      %p150 = scmp.ne.s32.totalorder %s138, %s139
      %p151 = scmp.eq.s32.totalorder %s24, 1
      %p152 = por %p150, %p151
      %p154 = scmp.ne.s32.totalorder %s139, %s153
      %p155 = scmp.eq.s32.totalorder %s24, 0
      %p156 = por %p154, %p155
      %s158 = sadd.s32 %s157, 1
      %p161 = scmp.eq.s32.totalorder %s18, 1
      %p162 = scmp.ne.s32.totalorder %s157, %s159
      %p163 = scmp.eq.s32.totalorder %s18, 0
      %p164 = por %p162, %p163
      %p165 = scmp.ne.s32.totalorder %s157, %s159
      %p166 = scmp.eq.s32.totalorder %s23, 1
      %p167 = por %p165, %p166
      %p168 = scmp.ne.s32.totalorder %s159, %s160
      %p169 = scmp.eq.s32.totalorder %s23, 0
      %p170 = por %p168, %p169
      %p171 = scmp.ne.s32.totalorder %s159, %s160
      %p172 = scmp.eq.s32.totalorder %s24, 1
      %p173 = por %p171, %p172
      %p175 = scmp.ne.s32.totalorder %s160, %s174
      %p176 = scmp.eq.s32.totalorder %s24, 0
      %p177 = por %p175, %p176
      %s178 = ssub.s32 %s18, %s25
      %p179 = scmp.eq.s32.totalorder %s178, 0
      %s181 = sadd.s32 %s180, 1
      %s182 = scalar_select %p179, %s180, %s181
      %p185 = pneg %p179
      %p186 = scmp.eq.s32.totalorder %s18, 1
      %p187 = por %p185, %p186
      %p188 = scmp.ne.s32.totalorder %s180, %s183
      %p189 = scmp.eq.s32.totalorder %s18, 0
      %p190 = por %p188, %p189
      %p191 = scmp.ne.s32.totalorder %s180, %s183
      %p192 = scmp.eq.s32.totalorder %s23, 1
      %p193 = por %p191, %p192
      %p194 = scmp.ne.s32.totalorder %s183, %s184
      %p195 = scmp.eq.s32.totalorder %s23, 0
      %p196 = por %p194, %p195
      %p197 = scmp.ne.s32.totalorder %s183, %s184
      %p198 = scmp.eq.s32.totalorder %s24, 1
      %p199 = por %p197, %p198
      %p201 = scmp.ne.s32.totalorder %s184, %s200
      %p202 = scmp.eq.s32.totalorder %s24, 0
      %p203 = por %p201, %p202
      %p204 = scmp.le.s32.totalorder 1, %s18
      %p205 = scmp.lt.s32.totalorder %s18, 3
      %p206 = pnand %p204, %p205
      %p207 = pneg %p206
      // Predicated region
      $region9: #{net_forward.1} parent=5 // pred_check
        _
      $region10: #{net_forward.1} parent=5 // pred_check_branch
        %209 = sbr.rel (%p206) target = $region12
      $region11: #{net_forward.1} parent=5 // pred_region
        %s210 = ssub.s32 %s18, 1
        // Predicated region
        $region13: #{net_forward.1} parent=11 // pred_check
          %p211 = pneg %p65
        $region14: #{net_forward.1} parent=11 // pred_check_branch
          %213 = sbr.rel (%p211) target = $region16
        $region15: #{net_forward.1} parent=11 // pred_region
          _
        $region16: #{net_forward.1} parent=11 // pred_fallthru
          _
        // Predicated region
        $region17: #{net_forward.1} parent=11 // pred_check
          %p214 = pneg %p86
        $region18: #{net_forward.1} parent=11 // pred_check_branch
          %216 = sbr.rel (%p214) target = $region20
        $region19: #{net_forward.1} parent=11 // pred_region
          _
        $region20: #{net_forward.1} parent=11 // pred_fallthru
          _
        // Predicated region
        $region21: #{net_forward.1} parent=11 // pred_check
          %p217 = pneg %p107
        $region22: #{net_forward.1} parent=11 // pred_check_branch
          %219 = sbr.rel (%p217) target = $region24
        $region23: #{net_forward.1} parent=11 // pred_region
          _
        $region24: #{net_forward.1} parent=11 // pred_fallthru
          _
        // Predicated region
        $region25: #{net_forward.1} parent=11 // pred_check
          %p220 = pneg %p128
        $region26: #{net_forward.1} parent=11 // pred_check_branch
          %222 = sbr.rel (%p220) target = $region28
        $region27: #{net_forward.1} parent=11 // pred_region
          _
        $region28: #{net_forward.1} parent=11 // pred_fallthru
          _
        // Predicated region
        $region29: #{net_forward.1} parent=11 // pred_check
          %p223 = pneg %p149
        $region30: #{net_forward.1} parent=11 // pred_check_branch
          %225 = sbr.rel (%p223) target = $region32
        $region31: #{net_forward.1} parent=11 // pred_region
          _
        $region32: #{net_forward.1} parent=11 // pred_fallthru
          _
        // Predicated region
        $region33: #{net_forward.1} parent=11 // pred_check
          %p226 = pneg %p170
        $region34: #{net_forward.1} parent=11 // pred_check_branch
          %228 = sbr.rel (%p226) target = $region36
        $region35: #{net_forward.1} parent=11 // pred_region
          _
        $region36: #{net_forward.1} parent=11 // pred_fallthru
          _
      $region12: #{net_forward.1} parent=5 // pred_fallthru
        _
      %p229 = scmp.lt.s32.totalorder %s18, 2
      // Predicated region
      $region37: #{net_forward.1} parent=5 // pred_check
        %p230 = pneg %p229
      $region38: #{net_forward.1} parent=5 // pred_check_branch
        %232 = sbr.rel (%p230) target = $region40
      $region39: #{net_forward.1} parent=5 // pred_region
        // Predicated region
        $region41: #{net_forward.1} parent=39 // pred_check
          %p233 = pneg %p38
        $region42: #{net_forward.1} parent=39 // pred_check_branch
          %235 = sbr.rel (%p233) target = $region44
        $region43: #{net_forward.1} parent=39 // pred_region
          %s236 = smul.u32 16, %s18
          %s237 = ssub.s32 25, %s236
          %p238 = scmp.lt.s32.totalorder %s237, 16
          %s239 = scalar_select %p238, %s237, 16
          %s240 = smul.u32 4, %s239
          %p241 = scmp.lt.s32.totalorder %s236, 24
          %s242 = scalar_select %p241, %s236, 24
          %s243 = smul.addr %s242, 4
          %s244 = scalar_lea.vmem %s0, %s243
          %s245 = smul.u32 16, %s18
          %s246 = ssub.s32 25, %s245
          %p247 = scmp.lt.s32.totalorder %s246, 16
          %s248 = scalar_select %p247, %s246, 16
          %s249 = smul.u32 4, %s248
        $region44: #{net_forward.1} parent=39 // pred_fallthru
          _
      $region40: #{net_forward.1} parent=5 // pred_fallthru
        _
      %p250 = scmp.le.s32.totalorder 1, %s18
      %p251 = scmp.lt.s32.totalorder %s18, 3
      %p252 = pnand %p250, %p251
      %p253 = pneg %p252
      // Predicated region
      $region45: #{net_forward.1} parent=5 // pred_check
        _
      $region46: #{net_forward.1} parent=5 // pred_check_branch
        %255 = sbr.rel (%p252) target = $region48
      $region47: #{net_forward.1} parent=5 // pred_region
        %s256 = ssub.s32 %s18, 1
        %s257 = smul.u32 16, %s23
        %s258 = ssub.s32 25, %s257
        %p259 = scmp.lt.s32.totalorder %s258, 16
        %s260 = scalar_select %p259, %s258, 16
        %s261 = smul.u32 4, %s260
        %p262 = scmp.lt.s32.totalorder %s257, 24
        %s263 = scalar_select %p262, %s257, 24
        %s264 = smul.addr %s263, 4
        %s265 = scalar_lea.vmem %s0, %s264
        %p266 = pneg %p44
        %p267 = pneg %p41
        %p268 = pneg %p65
        %p269 = pneg %p62
        %p270 = pneg %p86
        %p271 = pneg %p83
        %p272 = pneg %p107
        %p273 = pneg %p104
        %p274 = pneg %p128
        %p275 = pneg %p125
        %p276 = pneg %p149
        %p277 = pneg %p146
        %p278 = pneg %p170
        %p279 = pneg %p167
        %p280 = pneg %p196
        %p281 = pneg %p193
        %s282 = sand.u32 %s183, 1
        %s283 = scalar_lea.sflag [#allocation4], %s282
        %s284 = sand.u32 %s183, 1
        %s285 = scalar_lea.vmem [#allocation3], %s284
        %s286 = smul.u32 16, %s23
        %s287 = ssub.s32 25, %s286
        %p288 = scmp.lt.s32.totalorder %s287, 16
        %s289 = scalar_select %p288, %s287, 16
        %s290 = smul.u32 4, %s289
        %p291 = scmp.lt.s32.totalorder %s286, 24
        %s292 = scalar_select %p291, %s286, 24
        %s293 = smul.addr %s292, 4
        %s294 = scalar_lea.vmem %s0, %s293
        %s295 = smul.u32 16, %s23
        %s296 = ssub.s32 25, %s295
        %p297 = scmp.lt.s32.totalorder %s296, 16
        %s298 = scalar_select %p297, %s296, 16
        %s299 = smul.u32 4, %s298
        %v301 = vld [vmem:[%s294] sm:$0xf]
        %v302 = vld [vmem:[%s294 + $0x4] sm:$0xf]
        %v303 = vld [vmem:[%s294 + $0x8] sm:$0xf]
        %v304 = vld [vmem:[%s294 + $0xc] sm:$0xf]
        %v305 = vld [vmem:[%s294 + $0x10] sm:$0xf]
        %v306 = vld [vmem:[%s294 + $0x14] sm:$0xf]
        %v307 = vld [vmem:[%s294 + $0x18] sm:$0xf]
        %v308 = vld [vmem:[%s294 + $0x1c] sm:$0xf]
        %v309 = vld [vmem:[%s294 + $0x20] sm:$0xf]
        %v310 = vld [vmem:[%s294 + $0x24] sm:$0xf]
        %v311 = vld [vmem:[%s294 + $0x28] sm:$0xf]
        %v312 = vld [vmem:[%s294 + $0x2c] sm:$0xf]
        %v313 = vld [vmem:[%s294 + $0x30] sm:$0xf]
        %v314 = vld [vmem:[%s294 + $0x34] sm:$0xf]
        %v315 = vld [vmem:[%s294 + $0x38] sm:$0xf]
        %v316 = vld [vmem:[%s294 + $0x3c] sm:$0xf]
        %v317 = vld [vmem:[%s1] sm:$0xf]
        %v318 = vld [vmem:[%s1 + $0x4] sm:$0xf]
        %v319 = vld [vmem:[%s1 + $0x8] sm:$0xf]
        %v320 = vld [vmem:[%s1 + $0xc] sm:$0xf]
        %v321 = vld [vmem:[%s1 + $0x10] sm:$0xf]
        %v322 = vld [vmem:[%s1 + $0x14] sm:$0xf]
        %v323 = vld [vmem:[%s1 + $0x18] sm:$0xf]
        %v324 = vld [vmem:[%s1 + $0x1c] sm:$0xf]
        %v325 = vld [vmem:[%s2] sm:$0xff]
        %v326 = vld [vmem:[%s2 + $0x8] sm:$0xff]
        %v327 = vld [vmem:[%s2 + $0x10] sm:$0xff]
        %v328 = vld [vmem:[%s2 + $0x18] sm:$0xff]
        %v329 = vld [vmem:[%s2 + $0x20] sm:$0xff]
        %v330 = vld [vmem:[%s2 + $0x28] sm:$0xff]
        %v331 = vld [vmem:[%s2 + $0x30] sm:$0xff]
        %v332 = vld [vmem:[%s2 + $0x38] sm:$0xff]
        %334 = vset.pattern.permute.xlu0 0
        %335 = vperm.xlu0 %334, %v325
        %v336 = vpop.permute.xlu0 %335
        %339 = vset.pattern.permute.xlu0 0
        %340 = vperm.xlu0 %339, %v326
        %v341 = vpop.permute.xlu0 %340
        %344 = vset.pattern.permute.xlu0 0
        %345 = vperm.xlu0 %344, %v327
        %v346 = vpop.permute.xlu0 %345
        %349 = vset.pattern.permute.xlu0 0
        %350 = vperm.xlu0 %349, %v328
        %v351 = vpop.permute.xlu0 %350
        %354 = vset.pattern.permute.xlu0 0
        %355 = vperm.xlu0 %354, %v329
        %v356 = vpop.permute.xlu0 %355
        %359 = vset.pattern.permute.xlu0 0
        %360 = vperm.xlu0 %359, %v330
        %v361 = vpop.permute.xlu0 %360
        %364 = vset.pattern.permute.xlu0 0
        %365 = vperm.xlu0 %364, %v331
        %v366 = vpop.permute.xlu0 %365
        %369 = vset.pattern.permute.xlu0 0
        %370 = vperm.xlu0 %369, %v332
        %v371 = vpop.permute.xlu0 %370
        %v381 = vunpack.c.l.b16 %v317
        %v382 = vunpack.c.l.b16 %v318
        %v383 = vunpack.c.l.b16 %v319
        %v384 = vunpack.c.l.b16 %v320
        %v385 = vunpack.c.l.b16 %v321
        %v386 = vunpack.c.l.b16 %v322
        %v387 = vunpack.c.l.b16 %v323
        %v388 = vunpack.c.l.b16 %v324
        %v389 = vpack.c.b16 %v382, %v381
        %v390 = vpack.c.b16 %v384, %v383
        %v391 = vpack.c.b16 %v386, %v385
        %v392 = vpack.c.b16 %v388, %v387
        %v409 = vunpack.c.l.b16 %v301
        %v410 = vunpack.c.l.b16 %v302
        %v411 = vunpack.c.l.b16 %v303
        %v412 = vunpack.c.l.b16 %v304
        %v413 = vunpack.c.l.b16 %v305
        %v414 = vunpack.c.l.b16 %v306
        %v415 = vunpack.c.l.b16 %v307
        %v416 = vunpack.c.l.b16 %v308
        %v417 = vunpack.c.l.b16 %v309
        %v418 = vunpack.c.l.b16 %v310
        %v419 = vunpack.c.l.b16 %v311
        %v420 = vunpack.c.l.b16 %v312
        %v421 = vunpack.c.l.b16 %v313
        %v422 = vunpack.c.l.b16 %v314
        %v423 = vunpack.c.l.b16 %v315
        %v424 = vunpack.c.l.b16 %v316
        %v425 = vpack.c.b16 %v410, %v409
        %v426 = vpack.c.b16 %v412, %v411
        %v427 = vpack.c.b16 %v414, %v413
        %v428 = vpack.c.b16 %v416, %v415
        %v429 = vpack.c.b16 %v418, %v417
        %v430 = vpack.c.b16 %v420, %v419
        %v431 = vpack.c.b16 %v422, %v421
        %v432 = vpack.c.b16 %v424, %v423
        %vm433 = vcmask 261120
        %v435 = vsel %vm433, %v389, 0
        %v438 = vsel %vm433, %v390, 0
        %v441 = vsel %vm433, %v391, 0
        %v444 = vsel %vm433, %v392, 0
        %v447 = vsel %vm433, %v425, 0
        %v450 = vsel %vm433, %v426, 0
        %v453 = vsel %vm433, %v427, 0
        %v456 = vsel %vm433, %v428, 0
        %v459 = vsel %vm433, %v429, 0
        %v462 = vsel %vm433, %v430, 0
        %v465 = vsel %vm433, %v431, 0
        %v468 = vsel %vm433, %v432, 0
        %470 = vmatpush.bf16.xpose.msra.mxu0 %v468
        %471 = vmatpush.bf16.xpose.msra.mxu0 %v465
        %472 = vmatpush.bf16.xpose.msra.mxu0 %v462
        %473 = vmatpush.bf16.xpose.msra.mxu0 %v459
        %474 = vmatpush.bf16.xpose.msra.mxu0 %v456
        %475 = vmatpush.bf16.xpose.msra.mxu0 %v453
        %476 = vmatpush.bf16.xpose.msra.mxu0 %v450
        %477 = vmatpush.bf16.xpose.msra.mxu0 %v447
        %478 = vmatmul.bf16.gmra.mxu0 %v435
        %v479 = vpop.f32.mrf.mxu0
        %v480 = vadd.f32 %v336, %v479
        %v481 = vpop.f32.mrf.mxu0
        %v482 = vadd.f32 %v341, %v481
        %483 = vmatmul.bf16.gmra.mxu0 %v438
        %v484 = vpop.f32.mrf.mxu0
        %v485 = vadd.f32 %v346, %v484
        %v486 = vpop.f32.mrf.mxu0
        %v487 = vadd.f32 %v351, %v486
        %488 = vmatmul.bf16.gmra.mxu0 %v441
        %v489 = vpop.f32.mrf.mxu0
        %v490 = vadd.f32 %v356, %v489
        %v491 = vpop.f32.mrf.mxu0
        %v492 = vadd.f32 %v361, %v491
        %493 = vmatmul.bf16.gmra.mxu0 %v444
        %v494 = vpop.f32.mrf.mxu0
        %v495 = vadd.f32 %v366, %v494
        %v496 = vpop.f32.mrf.mxu0
        %v497 = vadd.f32 %v371, %v496
        %498 = vdwg.mxu0
        %v499 = vmax.f32 %v480, 0.0
        %v500 = vmax.f32 %v482, 0.0
        %v501 = vmax.f32 %v485, 0.0
        %v502 = vmax.f32 %v487, 0.0
        %v503 = vmax.f32 %v490, 0.0
        %v504 = vmax.f32 %v492, 0.0
        %v505 = vmax.f32 %v495, 0.0
        %v506 = vmax.f32 %v497, 0.0
        %v507 = vpack.c.bf16 %v500, %v499
        %v508 = vpack.c.bf16 %v502, %v501
        %v509 = vpack.c.bf16 %v504, %v503
        %v510 = vpack.c.bf16 %v506, %v505
        %v511 = vld [vmem:[%s3] sm:$0xf]
        %v512 = vld [vmem:[%s3 + $0x4] sm:$0xf]
        %v513 = vld [vmem:[%s3 + $0x8] sm:$0xf]
        %v514 = vld [vmem:[%s3 + $0xc] sm:$0xf]
        %v515 = vld [vmem:[%s4] sm:$0xff]
        %v516 = vld [vmem:[%s4 + $0x8] sm:$0xff]
        %v517 = vld [vmem:[%s4 + $0x10] sm:$0xff]
        %v518 = vld [vmem:[%s4 + $0x18] sm:$0xff]
        %520 = vset.pattern.permute.xlu0 0
        %521 = vperm.xlu0 %520, %v515
        %v522 = vpop.permute.xlu0 %521
        %525 = vset.pattern.permute.xlu0 0
        %526 = vperm.xlu0 %525, %v516
        %v527 = vpop.permute.xlu0 %526
        %530 = vset.pattern.permute.xlu0 0
        %531 = vperm.xlu0 %530, %v517
        %v532 = vpop.permute.xlu0 %531
        %535 = vset.pattern.permute.xlu0 0
        %536 = vperm.xlu0 %535, %v518
        %v537 = vpop.permute.xlu0 %536
        %v543 = vunpack.c.l.b16 %v511
        %v544 = vunpack.c.l.b16 %v512
        %v545 = vunpack.c.l.b16 %v513
        %v546 = vunpack.c.l.b16 %v514
        %v547 = vpack.c.b16 %v544, %v543
        %v548 = vpack.c.b16 %v546, %v545
        %vm549 = vcmask 523264
        %v551 = vsel %vm549, %v547, 0
        %v554 = vsel %vm549, %v548, 0
        %556 = vmatpush.bf16.msra.mxu0 0
        %557 = vmatpush.bf16.msra.mxu0 0
        %558 = vmatpush.bf16.msra.mxu0 0
        %559 = vmatpush.bf16.msra.mxu0 0
        %560 = vmatpush.bf16.msra.mxu0 %v510
        %561 = vmatpush.bf16.msra.mxu0 %v509
        %562 = vmatpush.bf16.msra.mxu0 %v508
        %563 = vmatpush.bf16.msra.mxu0 %v507
        %564 = vmatmul.bf16.gmra.mxu0 %v551
        %v565 = vpop.f32.mrf.mxu0
        %v566 = vadd.f32 %v522, %v565
        %v567 = vpop.f32.mrf.mxu0
        %v568 = vadd.f32 %v527, %v567
        %569 = vmatmul.bf16.gmra.mxu0 %v554
        %v570 = vpop.f32.mrf.mxu0
        %v571 = vadd.f32 %v532, %v570
        %v572 = vpop.f32.mrf.mxu0
        %v573 = vadd.f32 %v537, %v572
        %574 = vdwg.mxu0
        %v575 = vmax.f32 %v566, 0.0
        %v576 = vmax.f32 %v568, 0.0
        %v577 = vmax.f32 %v571, 0.0
        %v578 = vmax.f32 %v573, 0.0
        %v579 = vpack.c.bf16 %v575, %v575
        %v580 = vpack.c.bf16 %v576, %v576
        %v581 = vpack.c.bf16 %v577, %v577
        %v582 = vpack.c.bf16 %v578, %v578
        %v583 = vld [vmem:[%s5] sm:$0xff]
        %v584 = vld [vmem:[%s5 + $0x8] sm:$0xff]
        %v585 = vld [vmem:[%s5 + $0x10] sm:$0xff]
        %v586 = vld [vmem:[%s5 + $0x18] sm:$0xff]
        %v587 = vunpack.c.l.bf16 %v579
        %v588 = vunpack.c.l.bf16 %v580
        %v589 = vunpack.c.l.bf16 %v581
        %v590 = vunpack.c.l.bf16 %v582
        %592 = vset.pattern.permute.xlu0 0
        %593 = vperm.xlu0 %592, %v583
        %v594 = vpop.permute.xlu0 %593
        %597 = vset.pattern.permute.xlu0 0
        %598 = vperm.xlu0 %597, %v584
        %v599 = vpop.permute.xlu0 %598
        %602 = vset.pattern.permute.xlu0 0
        %603 = vperm.xlu0 %602, %v585
        %v604 = vpop.permute.xlu0 %603
        %607 = vset.pattern.permute.xlu0 0
        %608 = vperm.xlu0 %607, %v586
        %v609 = vpop.permute.xlu0 %608
        %v611 = vmul.f32 %v587, %v594
        %v612 = vmul.f32 %v588, %v599
        %v613 = vmul.f32 %v589, %v604
        %v614 = vmul.f32 %v590, %v609
        %v615 = vadd.f32 %v611, %v612
        %v616 = vadd.f32 %v615, %v613
        %v617 = vadd.f32 %v616, %v614
        %v618 = vrot.slane %v617, 4
        %v619 = vadd.f32 %v617, %v618
        %v620 = vrot.slane %v619, 2
        %v621 = vadd.f32 %v619, %v620
        %v622 = vrot.slane %v621, 1
        %v623 = vadd.f32 %v621, %v622
        %v624 = vld [vmem:[#allocation2] sm:$0x1]
        %626 = vset.pattern.permute.xlu0 0
        %627 = vperm.xlu0 %626, %v624
        %v628 = vpop.permute.xlu0 %627
        %v630 = vperm.slane %v628, 0
        %v631 = vadd.f32 %v623, %v630
        %v632 = vxor.u32 %v631, 2147483648
        %v633 = vmul.f32 %v632, 1.442695
        %v634 = vpow.pop %v633
        %v635 = vadd.f32 %v634, 1.0
        %v636 = vrcp.pop %v635
        %v637 = vmul.f32 %v635, %v636
        %v638 = vsub.f32 1.0, %v637
        %v639 = vmul.f32 %v636, %v638
        %v640 = vadd.f32 %v636, %v639
        %vm641 = vweird.f32 %v635
        %vm642 = vweird.f32 %v636
        %vm643 = vmor %vm641, %vm642
        %v644 = vsel %vm643, %v636, %v640
        %v645 = vand.u32 2147483647, %v635
        %vm646 = vcmp.eq.f32.partialorder %v645, 8.507059e+37
        %v647 = vand.u32 %v635, 2147483648
        %v648 = vor.u32 1.1754944e-38, %v647
        %v649 = vsel %vm646, %v648, %v644
        %v650 = vmul.f32 1.0, %v649
        %651 = vst [vmem:[%s285] sm:$0x1] %v650
        %s652 = sand.u32 %s183, 1
        %s653 = scalar_lea.sflag [#allocation4], %s652
        %s654 = sand.u32 %s183, 1
        %s655 = scalar_lea.vmem [#allocation3], %s654
        // Predicated region
        $region49: #{net_forward.1} parent=47 // pred_check
          %p656 = pneg %p193
        $region50: #{net_forward.1} parent=47 // pred_check_branch
          %658 = sbr.rel (%p656) target = $region52
        $region51: #{net_forward.1} parent=47 // pred_region
          %660 = vsyncadd %s653, 0
          %s661 = scalar_lea.hbm %s7, %s23
          %s663 = sshll.u32 %s655, 4
          %s664 = int_to_ptr.vmem [resolvable:$true] %s663
          %s665 = sshll.u32 %s661, 4
          %s666 = int_to_ptr.hbm [resolvable:$true] %s665
          %668 = dma.vmem_to_hbm [thread:$0]  %s664, 16, %s666, %s653
        $region52: #{net_forward.1} parent=47 // pred_fallthru
          _
      $region48: #{net_forward.1} parent=5 // pred_fallthru
        _
      %p669 = scmp.le.s32.totalorder 2, %s18
      // Predicated region
      $region53: #{net_forward.1} parent=5 // pred_check
        %p670 = pneg %p669
      $region54: #{net_forward.1} parent=5 // pred_check_branch
        %672 = sbr.rel (%p670) target = $region56
      $region55: #{net_forward.1} parent=5 // pred_region
        %s673 = ssub.s32 %s18, 2
        // Predicated region
        $region57: #{net_forward.1} parent=55 // pred_check
          %p674 = pneg %p199
        $region58: #{net_forward.1} parent=55 // pred_check_branch
          %676 = sbr.rel (%p674) target = $region60
        $region59: #{net_forward.1} parent=55 // pred_region
          %s677 = sand.u32 %s184, 1
          %s678 = scalar_lea.sflag [#allocation4], %s677
          %s679 = sand.u32 %s184, 1
          %s680 = scalar_lea.vmem [#allocation3], %s679
          %682 = dma.done %s678, 16
        $region60: #{net_forward.1} parent=55 // pred_fallthru
          _
      $region56: #{net_forward.1} parent=5 // pred_fallthru
        _
    $region6: #{net_forward.1} parent=1 // loop_footer
      %s22 = sadd.s32 1, %s18
    $region7: #{net_forward.1} parent=1 // loop_footer_branch
      %17 = sbr.rel target = $region3
    $region8: #{net_forward.1} parent=1 // loop_exit
      _
    %683 = vsyncpa [#allocation4], 1
    %s684 = scalar_lea.sflag [#allocation4], 1
    %685 = vsyncpa %s684, 1

</llo_original>
